<compile_context>
chip_gen: v6e
topology: v6e:2x2x1
jax: 0.10.0
libtpu: 0.0.40
codegen_flags: <defaults>
</compile_context>

<pallas_src>
import jax
import jax.numpy as jnp
from jax.experimental import pallas as pl
from jax.experimental.pallas import tpu as pltpu


def _round_up(x: int, m: int) -> int:
    return ((x + m - 1) // m) * m


def _vmem_capacity_bytes() -> int:
    try:
        return int(pltpu.get_tpu_info().vmem_capacity_bytes)
    except Exception:
        return 64 << 20  # conservative per-TensorCore value (v7x)


def _pick_tile(dim: int, target: int, align: int) -> int:
    """Tile for `dim`: aim for `target`, keep `align`-alignment, and prefer a
    tile that divides `dim` exactly (=> no wrapper-side jnp.pad HBM copies)."""
    aligned = _round_up(dim, align)
    if aligned <= target:
        return aligned                      # whole dim fits in one tile
    t = (target // align) * align
    cand = t
    while cand >= align:                    # largest align-multiple <= target
        if dim % cand == 0:                 # that divides dim exactly
            break
        cand -= align
    if cand >= max(align, t // 2):
        return cand                         # no padding needed
    return t                                # ragged tail -> small padding


def linear_kernel(x_ref, w_ref, b_ref, o_ref, acc_ref):
    """One (i, j, k) grid step of y = x @ W + b.

    x_ref: [tm, tk]   w_ref: [tk, tn]   b_ref: [1, tn] (f32)
    o_ref: [tm, tn]  (same (i, j) tile across all k)
    acc_ref: [tm, tn] f32 VMEM scratch accumulator
    """
    k = pl.program_id(2)

    @pl.when(k == 0)
    def _():
        # Fold the bias into the accumulator init: removes a VPU pass + vreg
        # pressure from the store epilogue.
        acc_ref[...] = jnp.broadcast_to(
            b_ref[...].astype(jnp.float32), acc_ref.shape
        )

    acc_ref[...] += jnp.dot(
        x_ref[...], w_ref[...], preferred_element_type=jnp.float32
    )

    @pl.when(k == pl.num_programs(2) - 1)
    def _():
        o_ref[...] = acc_ref[...].astype(o_ref.dtype)


def linear_forward(
    x: jax.Array,
    weight: jax.Array,
    bias: jax.Array,
    *,
    compute_dtype=jnp.bfloat16,   # bf16 by default; pass jnp.float32 for exact
    out_dtype=None,
    tm: int | None = None,
    tn: int | None = None,
    tk: int | None = None,
) -> jax.Array:
    """y = x @ weight + bias.   x: [M, K], weight: [K, N], bias: [N]."""
    M, K = x.shape
    K2, N = weight.shape
    assert K == K2, "in_features mismatch"
    assert bias.shape == (N,), "bias shape mismatch"
    out_dtype = out_dtype or x.dtype

    # Cast only when needed: stash weights in `compute_dtype` outside this
    # wrapper (parameter prep) to avoid a per-call HBM copy of W.
    if compute_dtype is not None:
        if x.dtype != jnp.dtype(compute_dtype):
            x = x.astype(compute_dtype)
        if weight.dtype != jnp.dtype(compute_dtype):
            weight = weight.astype(compute_dtype)
    elif x.dtype != weight.dtype:
        cd = jnp.promote_types(x.dtype, weight.dtype)
        x, weight = x.astype(cd), weight.astype(cd)

    itemsize = jnp.dtype(x.dtype).itemsize
    out_itemsize = jnp.dtype(out_dtype).itemsize
    phys_vmem = _vmem_capacity_bytes()
    big_vmem = phys_vmem > (96 << 20)       # v5e/v6e: 128 MiB/TC, v7x: 64 MiB/TC

    tm_target = 1024 if big_vmem else 512   # 256-aligned for the 2x256 MXUs
    tn_target = 1024
    tk_target = 1024 if itemsize <= 2 else 512

    tn_auto = tn is None
    tm = _pick_tile(M, tm_target, 8) if tm is None else min(_round_up(tm, 8), _round_up(M, 8))
    tn = _pick_tile(N, tn_target, 128) if tn is None else min(_round_up(tn, 128), _round_up(N, 128))
    tk = _pick_tile(K, tk_target, 128) if tk is None else min(_round_up(tk, 128), _round_up(K, 128))

    # v7x has 2 TensorCores: if the whole problem fits in one (i, j) block,
    # split N so both cores get work (only when it introduces no padding).
    if tn_auto and tm >= _round_up(M, 8) and tn >= _round_up(N, 128) >= 256:
        half = _round_up(_round_up(N, 128) // 2, 128)
        if _round_up(N, 128) % half == 0:
            tn = half

    # Pad only when genuinely ragged (zeros contribute nothing to the dot).
    Mp, Kp, Np = _round_up(M, tm), _round_up(K, tk), _round_up(N, tn)
    if (Mp, Kp) != (M, K):
        x = jnp.pad(x, ((0, Mp - M), (0, Kp - K)))
    if (Kp, Np) != (K, N):
        weight = jnp.pad(weight, ((0, Kp - K), (0, Np - N)))
    bias2d = bias.astype(jnp.float32).reshape(1, N)
    if Np != N:
        bias2d = jnp.pad(bias2d, ((0, 0), (0, Np - N)))

    grid = (Mp // tm, Np // tn, Kp // tk)
    m_blocks, n_blocks, k_blocks = grid

    # Small-M, weight-stream-bound regime: 3-deep buffer on the weight stream.
    w_spec, w_bufs = None, 2
    if tm <= 256 and k_blocks >= 2:
        try:
            w_spec = pl.BlockSpec((tk, tn), lambda i, j, k: (k, j),
                                  pipeline_mode=pl.Buffered(3))
            w_bufs = 3
        except Exception:
            w_spec = None
    if w_spec is None:
        w_spec = pl.BlockSpec((tk, tn), lambda i, j, k: (k, j))

    # Explicit VMEM limit sized from the actual tile footprint (+ headroom);
    # v5e's 16 MiB scoped default would trip on the large-tile configs.
    vmem_needed = (
        tm * tk * itemsize * 2            # x tiles (double-buffered)
        + tk * tn * itemsize * w_bufs     # W tiles
        + 8 * tn * 4 * 2                  # bias (sublane-padded)
        + tm * tn * out_itemsize * 2      # output tiles
        + tm * tn * 4                     # f32 accumulator scratch
    )
    vmem_limit = min(max(vmem_needed + (8 << 20), 32 << 20), phys_vmem)

    # Advisory cost: reflect actual re-streaming (W per M-block, x per N-block).
    cost = pl.CostEstimate(
        flops=2 * Mp * Np * Kp,
        transcendentals=0,
        bytes_accessed=(
            x.size * itemsize * n_blocks
            + weight.size * itemsize * m_blocks
            + bias2d.size * 4 * m_blocks
            + Mp * Np * out_itemsize
        ),
    )

    out = pl.pallas_call(
        linear_kernel,
        out_shape=jax.ShapeDtypeStruct((Mp, Np), out_dtype),
        grid=grid,
        in_specs=[
            pl.BlockSpec((tm, tk), lambda i, j, k: (i, k)),
            w_spec,
            pl.BlockSpec((1, tn), lambda i, j, k: (0, j)),
        ],
        out_specs=pl.BlockSpec((tm, tn), lambda i, j, k: (i, j)),
        scratch_shapes=[pltpu.VMEM((tm, tn), jnp.float32)],
        compiler_params=pltpu.CompilerParams(
            dimension_semantics=("parallel", "parallel", "arbitrary"),
            vmem_limit_bytes=vmem_limit,
        ),
        cost_estimate=cost,
    )(x, weight, bias2d)

    if (Mp, Np) != (M, N):
        out = out[:M, :N]
    return out


if __name__ == "__main__":
    # --- Test 1: exact module shapes/init, f32 compute for a tight check ----
    #   weight ~ N(0, 0.01), bias = 0, x: [batch_size, in_features]
    batch_size, in_features, out_features = 8, 32, 64

    key = jax.random.PRNGKey(0)
    kx, kw, kx2, kw2, kb2, kx3, kw3, kb3 = jax.random.split(key, 8)

    weight = 0.01 * jax.random.normal(kw, (in_features, out_features), dtype=jnp.float32)
    bias = jnp.zeros((out_features,), dtype=jnp.float32)
    x = jax.random.normal(kx, (batch_size, in_features), dtype=jnp.float32)

    y = linear_forward(x, weight, bias, compute_dtype=jnp.float32)
    jax.block_until_ready(y)
    y_ref = x @ weight + bias
    assert y.shape == (batch_size, out_features)
    assert jnp.allclose(y, y_ref, atol=1e-5, rtol=1e-5)

    # --- Test 2: default bf16 compute path, pre-cast weight, no padding -----
    M2, K2, N2 = 16, 256, 384
    w2_f32 = 0.01 * jax.random.normal(kw2, (K2, N2), dtype=jnp.float32)
    w2 = w2_f32.astype(jnp.bfloat16)      # weight stashed in bf16 once (param prep)
    b2 = jax.random.normal(kb2, (N2,), dtype=jnp.float32)
    x2 = jax.random.normal(kx2, (M2, K2), dtype=jnp.float32)

    y2 = linear_forward(x2, w2, b2)       # bf16 compute, f32 accumulate/output
    jax.block_until_ready(y2)
    y2_ref = x2 @ w2_f32 + b2
    assert y2.shape == (M2, N2)
    assert y2.dtype == x2.dtype
    assert jnp.allclose(y2, y2_ref, atol=5e-2, rtol=5e-2)

    # --- Test 3: multi-tile grid (K reduction + N blocks) + Buffered weight --
    M3, K3, N3 = 8, 384, 256
    w3_f32 = 0.01 * jax.random.normal(kw3, (K3, N3), dtype=jnp.float32)
    w3 = w3_f32.astype(jnp.bfloat16)
    b3 = jax.random.normal(kb3, (N3,), dtype=jnp.float32)
    x3 = jax.random.normal(kx3, (M3, K3), dtype=jnp.float32)

    y3 = linear_forward(x3, w3, b3, tn=128, tk=128)   # grid (1, 2, 3)
    jax.block_until_ready(y3)
    y3_ref = x3 @ w3_f32 + b3
    assert y3.shape == (M3, N3)
    assert jnp.allclose(y3, y3_ref, atol=5e-2, rtol=5e-2)

    print("KERNEL_OK")
</pallas_src>

<mosaic_0001>
module attributes {stable_mosaic.version = 11 : i64} {
  func.func @linear_kernel(%arg0: i32, %arg1: i32, %arg2: i32, %arg3: memref<8x128xf32, #tpu.memory_space<vmem>>, %arg4: memref<128x128xf32, #tpu.memory_space<vmem>>, %arg5: memref<1x128xf32, #tpu.memory_space<vmem>>, %arg6: memref<8x128xf32, #tpu.memory_space<vmem>>, %arg7: memref<8x128xf32, #tpu.memory_space<vmem>>) attributes {dimension_semantics = [#tpu.dimension_semantics<parallel>, #tpu.dimension_semantics<parallel>, #tpu.dimension_semantics<arbitrary>], iteration_bounds = array<i64: 1, 1, 1>, scalar_prefetch = 0 : i64, scratch_operands = 1 : i64, tpu.core_type = #tpu.core_type<tc>, window_params = [{transform_indices = @transform_0, window_bounds = array<i64: 8, 128>}, {transform_indices = @transform_1, window_bounds = array<i64: 128, 128>}, {transform_indices = @transform_2, window_bounds = array<i64: 1, 128>}, {transform_indices = @transform_3, window_bounds = array<i64: 8, 128>}]} {
    %c0_i32 = arith.constant 0 : i32
    %0 = arith.cmpi eq, %arg2, %c0_i32 : i32
    %1 = arith.extui %0 : i1 to i32
    %c0_i32_0 = arith.constant 0 : i32
    %2 = arith.cmpi ne, %1, %c0_i32_0 : i32
    scf.if %2 {
      %c0_10 = arith.constant 0 : index
      %c0_11 = arith.constant 0 : index
      %12 = vector.load %arg5[%c0_10, %c0_11] : memref<1x128xf32, #tpu.memory_space<vmem>>, vector<1x128xf32>
      %13 = vector.shape_cast %12 : vector<1x128xf32> to vector<1x128xf32>
      %14 = vector.broadcast %13 : vector<1x128xf32> to vector<8x128xf32>
      %c0_12 = arith.constant 0 : index
      %c0_13 = arith.constant 0 : index
      %15 = vector.load %arg7[%c0_12, %c0_13] : memref<8x128xf32, #tpu.memory_space<vmem>>, vector<8x128xf32>
      tpu.vector_store %arg7[%c0_12, %c0_13], %14 {strides = array<i32>} : memref<8x128xf32, #tpu.memory_space<vmem>>, vector<8x128xf32>,
    } else {
    }
    %c0 = arith.constant 0 : index
    %c0_1 = arith.constant 0 : index
    %3 = vector.load %arg7[%c0, %c0_1] : memref<8x128xf32, #tpu.memory_space<vmem>>, vector<8x128xf32>
    %c0_2 = arith.constant 0 : index
    %c0_3 = arith.constant 0 : index
    %4 = vector.load %arg3[%c0_2, %c0_3] : memref<8x128xf32, #tpu.memory_space<vmem>>, vector<8x128xf32>
    %c0_4 = arith.constant 0 : index
    %c0_5 = arith.constant 0 : index
    %5 = vector.load %arg4[%c0_4, %c0_5] : memref<128x128xf32, #tpu.memory_space<vmem>>, vector<128x128xf32>
    %cst = arith.constant dense<0.000000e+00> : vector<8x128xf32>
    %6 = tpu.matmul %4, %5, %cst {dimension_numbers = #tpu.dot_dimension_numbers<[1], [0], [0], [1], [0, 0, 1, 1], [], []>} : vector<8x128xf32>, vector<128x128xf32>, vector<8x128xf32> -> vector<8x128xf32>
    %7 = arith.addf %3, %6 : vector<8x128xf32>
    %c0_6 = arith.constant 0 : index
    %c0_7 = arith.constant 0 : index
    %8 = vector.load %arg7[%c0_6, %c0_7] : memref<8x128xf32, #tpu.memory_space<vmem>>, vector<8x128xf32>
    tpu.vector_store %arg7[%c0_6, %c0_7], %7 {strides = array<i32>} : memref<8x128xf32, #tpu.memory_space<vmem>>, vector<8x128xf32>,
    %c0_i32_8 = arith.constant 0 : i32
    %9 = arith.cmpi eq, %arg2, %c0_i32_8 : i32
    %10 = arith.extui %9 : i1 to i32
    %c0_i32_9 = arith.constant 0 : i32
    %11 = arith.cmpi ne, %10, %c0_i32_9 : i32
    scf.if %11 {
      %c0_10 = arith.constant 0 : index
      %c0_11 = arith.constant 0 : index
      %12 = vector.load %arg7[%c0_10, %c0_11] : memref<8x128xf32, #tpu.memory_space<vmem>>, vector<8x128xf32>
      %c0_12 = arith.constant 0 : index
      %c0_13 = arith.constant 0 : index
      %13 = vector.load %arg6[%c0_12, %c0_13] : memref<8x128xf32, #tpu.memory_space<vmem>>, vector<8x128xf32>
      tpu.vector_store %arg6[%c0_12, %c0_13], %12 {strides = array<i32>} : memref<8x128xf32, #tpu.memory_space<vmem>>, vector<8x128xf32>,
    } else {
    }
    return
  }
  func.func @transform_0(%arg0: i32, %arg1: i32, %arg2: i32) -> (i32, i32) {
    %c0_i32 = arith.constant 0 : i32
    return %arg0, %arg2 : i32, i32
  }
  func.func @transform_1(%arg0: i32, %arg1: i32, %arg2: i32) -> (i32, i32) {
    %c0_i32 = arith.constant 0 : i32
    return %arg2, %arg1 : i32, i32
  }
  func.func @transform_2(%arg0: i32, %arg1: i32, %arg2: i32) -> (i32, i32) {
    %c0_i32 = arith.constant 0 : i32
    %c0_i32_0 = arith.constant 0 : i32
    return %c0_i32, %arg1 : i32, i32
  }
  func.func @transform_3(%arg0: i32, %arg1: i32, %arg2: i32) -> (i32, i32) {
    %c0_i32 = arith.constant 0 : i32
    return %arg0, %arg1 : i32, i32
  }
}

</mosaic_0001>

<llo_original>
// kernel: tpu_custom_call.1
$region0: #{tpu_custom_call.1}
  #allocation0 [shape = 'u32[]', space=smem, size = 0x4, offset = 0x4, fixed_abs, tag = 'smem constant byte address 0x4 - core index']
  #allocation1 [shape = 'u32[144,128]{1,0:T(1,128)}', space=vmem, size = 0x12000, scoped, tag = 'internal scratch']
  #allocation2 [shape = 'f32[8,128]{1,0:T(8,128)}', space=vmem, size = 0x1000, scoped, tag = 'scratch operand']
  %s0 = inlined_call_operand.hbm [shape: f32[8,128], index: 0, kind: input, shape index: {}]
  %s1 = inlined_call_operand.hbm [shape: f32[128,128], index: 1, kind: input, shape index: {}]
  %s2 = inlined_call_operand.vmem [shape: f32[1,128], index: 2, kind: input, shape index: {}]
  %s3 = inlined_call_operand.hbm [shape: f32[8,128], index: 3, kind: output, shape index: {}]
  %s4 = sld [smem:[#allocation0]]
  $region38: #{tpu_custom_call.1} parent=0
    _
  %s6 = ssub.s32 1, %s4
  %s7 = scalar_select 0, %s6, %s4
  $region1: #{tpu_custom_call.1} parent=0
    #allocation3 [shape = 'u8[4096]{0}', space=vmem, size = 0x1000, scoped, tag = 'input window, operand 0, single buffered']
    #allocation4 [shape = 's32[1]{0}', space=sflag, size = 0x4, scoped, tag = 'scoped memory for tpu_custom_call.1']
    #allocation5 [shape = 's32[1]{0}', space=sflag, size = 0x4, scoped, tag = 'scoped memory for tpu_custom_call.1']
    #allocation6 [shape = 'u8[65536]{0}', space=vmem, size = 0x10000, scoped, tag = 'input window, operand 1, single buffered']
    #allocation7 [shape = 's32[1]{0}', space=sflag, size = 0x4, scoped, tag = 'scoped memory for tpu_custom_call.1']
    #allocation8 [shape = 'u8[4096]{0}', space=vmem, size = 0x1000, scoped, tag = 'output window, operand 0, single buffered']
    %8 = vsyncpa [#allocation4], 0
    %9 = vsyncpa [#allocation7], 0
    %10 = vsyncpa [#allocation5], 0
    // Predicated region
    $region2: #{tpu_custom_call.1} parent=1 // pred_check
      _
    $region3: #{tpu_custom_call.1} parent=1 // pred_check_branch
      %12 = sbr.rel (0) target = $region5
    $region4: #{tpu_custom_call.1} parent=1 // pred_region
      %s14 = ssub.s32 128, 128
      %15 = vsyncadd [#allocation4], %s14
      %s17 = sshll.u32 [#allocation3], 4
      %s18 = int_to_ptr.vmem [resolvable:$true] %s17
      %20 = dma.hbm_to_vmem [thread:$0]  %s0, 128, %s18, [#allocation4]
    $region5: #{tpu_custom_call.1} parent=1 // pred_fallthru
      _
    // Predicated region
    $region6: #{tpu_custom_call.1} parent=1 // pred_check
      _
    $region7: #{tpu_custom_call.1} parent=1 // pred_check_branch
      %22 = sbr.rel (0) target = $region9
    $region8: #{tpu_custom_call.1} parent=1 // pred_region
      %s24 = ssub.s32 2048, 2048
      %25 = vsyncadd [#allocation7], %s24
      %s26 = sshll.u32 [#allocation6], 4
      %s27 = int_to_ptr.vmem [resolvable:$true] %s26
      %32 = dma.hbm_to_vmem [thread:$0]  %s1, 2048, %s27, [#allocation7], 128, 128, 8
    $region9: #{tpu_custom_call.1} parent=1 // pred_fallthru
      _
    // Predicated region
    $region10: #{tpu_custom_call.1} parent=1 // pred_check
      _
    $region11: #{tpu_custom_call.1} parent=1 // pred_check_branch
      %34 = sbr.rel (0) target = $region13
    $region12: #{tpu_custom_call.1} parent=1 // pred_region
      _
    $region13: #{tpu_custom_call.1} parent=1 // pred_fallthru
      _
    // Predicated region
    $region14: #{tpu_custom_call.1} parent=1 // pred_check
      _
    $region15: #{tpu_custom_call.1} parent=1 // pred_check_branch
      %36 = sbr.rel (0) target = $region17
    $region16: #{tpu_custom_call.1} parent=1 // pred_region
      %37 = dma.done [#allocation4], 128
    $region17: #{tpu_custom_call.1} parent=1 // pred_fallthru
      _
    // Predicated region
    $region18: #{tpu_custom_call.1} parent=1 // pred_check
      _
    $region19: #{tpu_custom_call.1} parent=1 // pred_check_branch
      %39 = sbr.rel (0) target = $region21
    $region20: #{tpu_custom_call.1} parent=1 // pred_region
      %40 = dma.done [#allocation7], 2048
    $region21: #{tpu_custom_call.1} parent=1 // pred_fallthru
      _
    %p41 = scmp.eq.s32.totalorder 0, 0
    // Predicated region
    $region22: #{tpu_custom_call.1} parent=1 // pred_check
      %p42 = pneg %p41
    $region23: #{tpu_custom_call.1} parent=1 // pred_check_branch
      %44 = sbr.rel (%p42) target = $region25
    $region24: #{tpu_custom_call.1} parent=1 // pred_region
      %v45 = vld [vmem:[%s2] sm:$0x1]
      %v47 = vlaneseq
      %v48 = vshrl.u32 %v47, 7
      %v49 = vsub.s32 0, %v48
      %v50 = vrot.slane %v45, %v49
      %52 = vst [vmem:[#allocation2] sm:$0xff] %v50
    $region25: #{tpu_custom_call.1} parent=1 // pred_fallthru
      _
    %v53 = vld [vmem:[#allocation2] sm:$0xff]
    %v54 = vld [vmem:[#allocation3] sm:$0xff]
    %v55 = vld [vmem:[#allocation6] sm:$0xff]
    %v56 = vld [vmem:[#allocation6 + $0x8] sm:$0xff]
    %v57 = vld [vmem:[#allocation6 + $0x10] sm:$0xff]
    %v58 = vld [vmem:[#allocation6 + $0x18] sm:$0xff]
    %v59 = vld [vmem:[#allocation6 + $0x20] sm:$0xff]
    %v60 = vld [vmem:[#allocation6 + $0x28] sm:$0xff]
    %v61 = vld [vmem:[#allocation6 + $0x30] sm:$0xff]
    %v62 = vld [vmem:[#allocation6 + $0x38] sm:$0xff]
    %v63 = vld [vmem:[#allocation6 + $0x40] sm:$0xff]
    %v64 = vld [vmem:[#allocation6 + $0x48] sm:$0xff]
    %v65 = vld [vmem:[#allocation6 + $0x50] sm:$0xff]
    %v66 = vld [vmem:[#allocation6 + $0x58] sm:$0xff]
    %v67 = vld [vmem:[#allocation6 + $0x60] sm:$0xff]
    %v68 = vld [vmem:[#allocation6 + $0x68] sm:$0xff]
    %v69 = vld [vmem:[#allocation6 + $0x70] sm:$0xff]
    %v70 = vld [vmem:[#allocation6 + $0x78] sm:$0xff]
    %71 = vmatprep.subr.mxu0 0.0
    %72 = vmatpush1.msra.mxu0 %v70
    %73 = vmatprep.subr.mxu0 0.0
    %74 = vmatpush1.msra.mxu0 %v69
    %75 = vmatprep.subr.mxu0 0.0
    %76 = vmatpush1.msra.mxu0 %v68
    %77 = vmatprep.subr.mxu0 0.0
    %78 = vmatpush1.msra.mxu0 %v67
    %79 = vmatprep.subr.mxu0 0.0
    %80 = vmatpush1.msra.mxu0 %v66
    %81 = vmatprep.subr.mxu0 0.0
    %82 = vmatpush1.msra.mxu0 %v65
    %83 = vmatprep.subr.mxu0 0.0
    %84 = vmatpush1.msra.mxu0 %v64
    %85 = vmatprep.subr.mxu0 0.0
    %86 = vmatpush1.msra.mxu0 %v63
    %87 = vmatprep.subr.mxu0 0.0
    %88 = vmatpush1.msra.mxu0 %v62
    %89 = vmatprep.subr.mxu0 0.0
    %90 = vmatpush1.msra.mxu0 %v61
    %91 = vmatprep.subr.mxu0 0.0
    %92 = vmatpush1.msra.mxu0 %v60
    %93 = vmatprep.subr.mxu0 0.0
    %94 = vmatpush1.msra.mxu0 %v59
    %95 = vmatprep.subr.mxu0 0.0
    %96 = vmatpush1.msra.mxu0 %v58
    %97 = vmatprep.subr.mxu0 0.0
    %98 = vmatpush1.msra.mxu0 %v57
    %99 = vmatprep.subr.mxu0 0.0
    %100 = vmatpush1.msra.mxu0 %v56
    %101 = vmatprep.subr.mxu0 0.0
    %102 = vmatpush1.msra.mxu0 %v55
    %103 = vmatprep.subr.mxu0 0.0
    %104 = vmatpush2.msra.mxu0 0.0
    %105 = vmatprep.subr.mxu0 0.0
    %106 = vmatpush2.msra.mxu0 0.0
    %107 = vmatprep.subr.mxu0 0.0
    %108 = vmatpush2.msra.mxu0 0.0
    %109 = vmatprep.subr.mxu0 0.0
    %110 = vmatpush2.msra.mxu0 0.0
    %111 = vmatprep.subr.mxu0 0.0
    %112 = vmatpush2.msra.mxu0 0.0
    %113 = vmatprep.subr.mxu0 0.0
    %114 = vmatpush2.msra.mxu0 0.0
    %115 = vmatprep.subr.mxu0 0.0
    %116 = vmatpush2.msra.mxu0 0.0
    %117 = vmatprep.subr.mxu0 0.0
    %118 = vmatpush2.msra.mxu0 0.0
    %119 = vmatprep.subr.mxu0 0.0
    %120 = vmatpush2.msra.mxu0 0.0
    %121 = vmatprep.subr.mxu0 0.0
    %122 = vmatpush2.msra.mxu0 0.0
    %123 = vmatprep.subr.mxu0 0.0
    %124 = vmatpush2.msra.mxu0 0.0
    %125 = vmatprep.subr.mxu0 0.0
    %126 = vmatpush2.msra.mxu0 0.0
    %127 = vmatprep.subr.mxu0 0.0
    %128 = vmatpush2.msra.mxu0 0.0
    %129 = vmatprep.subr.mxu0 0.0
    %130 = vmatpush2.msra.mxu0 0.0
    %131 = vmatprep.subr.mxu0 0.0
    %132 = vmatpush2.msra.mxu0 0.0
    %133 = vmatprep.subr.mxu0 0.0
    %134 = vmatpush2.msra.mxu0 0.0
    %135 = vmatprep.mubr.f32.mxu0 0.0
    %136 = vmatmul.mubr.f32.gmra.mxu0 %v54
    %v137 = vpop.f32.mrf.mxu0
    %v138 = vadd.f32 0.0, %v137
    %v139 = vpop.f32.mrf.mxu0
    %140 = vdwg.mxu0
    %v141 = vadd.f32 %v53, %v138
    %142 = vst [vmem:[#allocation2] sm:$0xff] %v141
    // Predicated region
    $region26: #{tpu_custom_call.1} parent=1 // pred_check
      %p143 = pneg %p41
    $region27: #{tpu_custom_call.1} parent=1 // pred_check_branch
      %145 = sbr.rel (%p143) target = $region29
    $region28: #{tpu_custom_call.1} parent=1 // pred_region
      %v146 = vld [vmem:[#allocation2] sm:$0xff]
      %147 = vst [vmem:[#allocation8] sm:$0xff] %v146
    $region29: #{tpu_custom_call.1} parent=1 // pred_fallthru
      _
    // Predicated region
    $region30: #{tpu_custom_call.1} parent=1 // pred_check
      _
    $region31: #{tpu_custom_call.1} parent=1 // pred_check_branch
      %149 = sbr.rel (0) target = $region33
    $region32: #{tpu_custom_call.1} parent=1 // pred_region
      %s151 = ssub.s32 128, 128
      %152 = vsyncadd [#allocation5], %s151
      %s154 = sshll.u32 [#allocation8], 4
      %s155 = int_to_ptr.vmem [resolvable:$true] %s154
      %157 = dma.vmem_to_hbm [thread:$0]  %s155, 128, %s3, [#allocation5]
    $region33: #{tpu_custom_call.1} parent=1 // pred_fallthru
      _
    // Predicated region
    $region34: #{tpu_custom_call.1} parent=1 // pred_check
      _
    $region35: #{tpu_custom_call.1} parent=1 // pred_check_branch
      %159 = sbr.rel (0) target = $region37
    $region36: #{tpu_custom_call.1} parent=1 // pred_region
      %160 = dma.done [#allocation5], 128
    $region37: #{tpu_custom_call.1} parent=1 // pred_fallthru
      _
    %161 = vsyncpa [#allocation4], 1
    %162 = vsyncpa [#allocation7], 1
    %163 = vsyncpa [#allocation5], 1

</llo_original>
